<compile_context>
chip_gen: v6e
topology: v6e:2x2x1
jax: 0.10.0
libtpu: 0.0.40
codegen_flags: <defaults>
</compile_context>

<pallas_src>
import jax
import jax.numpy as jnp
from jax.experimental import pallas as pl
from jax.experimental.pallas import tpu as pltpu

HIDDEN = 256
BN_EPS = 1e-5
LEAKY_SLOPE = 0.01          # PyTorch nn.LeakyReLU default negative_slope
MODEL2_IN = 1204
MODEL2_OUT = 10
MODEL2_OUT_PAD = 128        # lane-dense padded output width


# ----------------------------------------------------------------------------
# Fused kernel:
#   feature = LeakyReLU(BatchNorm1d(x @ w1 + b1))     (train-mode batch stats)
#   output  = x2 @ w2_pad + b2_pad                    (lane-dense, padded N=128)
# ----------------------------------------------------------------------------
def _fused_kernel(x_ref, w1_ref, b1_ref, gamma_ref, beta_ref,
                  x2_ref, w2_ref, b2_ref,
                  feat_ref, out_ref):
    # ---- model1: Linear (MXU, f32 accumulate) ----
    y = jnp.dot(x_ref[...], w1_ref[...], preferred_element_type=jnp.float32)
    y = y + b1_ref[...]

    # ---- BatchNorm1d, training mode, one-pass stats (sum & sum-of-squares) ----
    inv_b = jnp.float32(1.0 / y.shape[0])
    s = jnp.sum(y, axis=0, keepdims=True)
    ss = jnp.sum(y * y, axis=0, keepdims=True)
    mean = s * inv_b
    var = ss * inv_b - mean * mean          # biased variance (PyTorch train mode)
    y = (y - mean) * jax.lax.rsqrt(var + BN_EPS)
    y = y * gamma_ref[...] + beta_ref[...]

    # ---- LeakyReLU(0.01) ----
    feat_ref[...] = jnp.where(y > 0, y, LEAKY_SLOPE * y)

    # ---- model2: Linear 1204 -> 128 (zero-padded from 10), lane-dense store ----
    z = jnp.dot(x2_ref[...], w2_ref[...], preferred_element_type=jnp.float32)
    out_ref[...] = z + b2_ref[...]


def wgan_feature_critic_forward(x, x2, params):
    """feature = model1(x); output = model2(x2)  (single fused pallas_call)."""
    B, D = x.shape
    H = params["w1"].shape[1]
    K = x2.shape[1]
    N = params["w2"].shape[1]
    NP = MODEL2_OUT_PAD

    # Zero-pad model2 weights/bias so the kernel's output block is lane-dense.
    w2p = jnp.zeros((K, NP), jnp.float32).at[:, :N].set(params["w2"])
    b2p = jnp.zeros((1, NP), jnp.float32).at[:, :N].set(params["b2"])

    vmem = pl.BlockSpec(memory_space=pltpu.MemorySpace.VMEM)

    flops = 2 * B * D * H + 2 * B * K * NP + 8 * B * H
    bytes_accessed = 4 * (x.size + params["w1"].size + 3 * H
                          + x2.size + w2p.size + NP
                          + B * H + B * NP)

    feat, out_pad = pl.pallas_call(
        _fused_kernel,
        out_shape=(jax.ShapeDtypeStruct((B, H), jnp.float32),
                   jax.ShapeDtypeStruct((B, NP), jnp.float32)),
        in_specs=[vmem] * 8,
        out_specs=(vmem, vmem),
        cost_estimate=pl.CostEstimate(flops=flops, transcendentals=0,
                                      bytes_accessed=bytes_accessed),
    )(x, params["w1"], params["b1"], params["gamma"], params["beta"],
      x2, w2p, b2p)

    return feat, out_pad[:, :N]


# ----------------------------------------------------------------------------
# Deterministic parameter init (mimics PyTorch's default Linear init bounds)
# ----------------------------------------------------------------------------
def init_params(key, input_dim):
    k1, k2, k3, k4 = jax.random.split(key, 4)
    bound1 = 1.0 / jnp.sqrt(input_dim)
    w1 = jax.random.uniform(k1, (input_dim, HIDDEN), jnp.float32, -bound1, bound1)
    b1 = jax.random.uniform(k2, (1, HIDDEN), jnp.float32, -bound1, bound1)
    gamma = jnp.ones((1, HIDDEN), jnp.float32)
    beta = jnp.zeros((1, HIDDEN), jnp.float32)
    bound2 = 1.0 / jnp.sqrt(float(MODEL2_IN))
    w2 = jax.random.uniform(k3, (MODEL2_IN, MODEL2_OUT), jnp.float32, -bound2, bound2)
    b2 = jax.random.uniform(k4, (1, MODEL2_OUT), jnp.float32, -bound2, bound2)
    return {"w1": w1, "b1": b1, "gamma": gamma, "beta": beta,
            "w2": w2, "b2": b2}


if __name__ == "__main__":
    key = jax.random.PRNGKey(0)
    k_in, k_in2, k_params = jax.random.split(key, 3)

    batch = 8
    input_dim = 32
    x = jax.random.normal(k_in, (batch, input_dim), jnp.float32)
    x2 = jax.random.normal(k_in2, (batch, MODEL2_IN), jnp.float32)

    params = init_params(k_params, input_dim)

    feature, output = wgan_feature_critic_forward(x, x2, params)
    jax.block_until_ready((feature, output))

    # Pure-JAX reference check (Linear + train-mode BatchNorm1d + LeakyReLU)
    y_ref = x @ params["w1"] + params["b1"]
    mean = y_ref.mean(axis=0, keepdims=True)
    var = ((y_ref - mean) ** 2).mean(axis=0, keepdims=True)
    y_ref = (y_ref - mean) / jnp.sqrt(var + BN_EPS)
    y_ref = y_ref * params["gamma"] + params["beta"]
    feat_ref = jnp.where(y_ref > 0, y_ref, LEAKY_SLOPE * y_ref)
    out_ref = x2 @ params["w2"] + params["b2"]

    assert feature.shape == (batch, HIDDEN)
    assert output.shape == (batch, MODEL2_OUT)
    assert jnp.allclose(feature, feat_ref, atol=1e-4, rtol=1e-4)
    assert jnp.allclose(output, out_ref, atol=1e-4, rtol=1e-4)

    print("KERNEL_OK")
</pallas_src>

<mosaic_0001>
module attributes {stable_mosaic.version = 11 : i64} {
  func.func @_fused_kernel(%arg0: memref<8x32xf32, #tpu.memory_space<vmem>>, %arg1: memref<32x256xf32, #tpu.memory_space<vmem>>, %arg2: memref<1x256xf32, #tpu.memory_space<vmem>>, %arg3: memref<1x256xf32, #tpu.memory_space<vmem>>, %arg4: memref<1x256xf32, #tpu.memory_space<vmem>>, %arg5: memref<8x1204xf32, #tpu.memory_space<vmem>>, %arg6: memref<1204x128xf32, #tpu.memory_space<vmem>>, %arg7: memref<1x128xf32, #tpu.memory_space<vmem>>, %arg8: memref<8x256xf32, #tpu.memory_space<vmem>>, %arg9: memref<8x128xf32, #tpu.memory_space<vmem>>) attributes {dimension_semantics = [], scalar_prefetch = 0 : i64, scratch_operands = 0 : i64, tpu.core_type = #tpu.core_type<tc>} {
    %c0 = arith.constant 0 : index
    %c0_0 = arith.constant 0 : index
    %0 = vector.load %arg0[%c0, %c0_0] : memref<8x32xf32, #tpu.memory_space<vmem>>, vector<8x32xf32>
    %c0_1 = arith.constant 0 : index
    %c0_2 = arith.constant 0 : index
    %1 = vector.load %arg1[%c0_1, %c0_2] : memref<32x256xf32, #tpu.memory_space<vmem>>, vector<32x256xf32>
    %cst = arith.constant dense<0.000000e+00> : vector<8x256xf32>
    %2 = tpu.matmul %0, %1, %cst {dimension_numbers = #tpu.dot_dimension_numbers<[1], [0], [0], [1], [0, 0, 1, 1], [], []>} : vector<8x32xf32>, vector<32x256xf32>, vector<8x256xf32> -> vector<8x256xf32>
    %c0_3 = arith.constant 0 : index
    %c0_4 = arith.constant 0 : index
    %3 = vector.load %arg2[%c0_3, %c0_4] : memref<1x256xf32, #tpu.memory_space<vmem>>, vector<1x256xf32>
    %4 = vector.broadcast %3 : vector<1x256xf32> to vector<8x256xf32>
    %5 = arith.addf %2, %4 : vector<8x256xf32>
    %cst_5 = arith.constant dense<0.000000e+00> : vector<256xf32>
    %6 = vector.multi_reduction <add>, %5, %cst_5 [0] : vector<8x256xf32> to vector<256xf32>
    %7 = vector.shape_cast %6 : vector<256xf32> to vector<1x256xf32>
    %8 = arith.mulf %5, %5 : vector<8x256xf32>
    %cst_6 = arith.constant dense<0.000000e+00> : vector<256xf32>
    %9 = vector.multi_reduction <add>, %8, %cst_6 [0] : vector<8x256xf32> to vector<256xf32>
    %10 = vector.shape_cast %9 : vector<256xf32> to vector<1x256xf32>
    %cst_7 = arith.constant 1.250000e-01 : f32
    %11 = vector.broadcast %cst_7 : f32 to vector<1x256xf32>
    %12 = arith.mulf %7, %11 : vector<1x256xf32>
    %cst_8 = arith.constant 1.250000e-01 : f32
    %13 = vector.broadcast %cst_8 : f32 to vector<1x256xf32>
    %14 = arith.mulf %10, %13 : vector<1x256xf32>
    %15 = arith.mulf %12, %12 : vector<1x256xf32>
    %16 = arith.subf %14, %15 : vector<1x256xf32>
    %17 = vector.broadcast %12 : vector<1x256xf32> to vector<8x256xf32>
    %18 = arith.subf %5, %17 : vector<8x256xf32>
    %cst_9 = arith.constant 9.99999974E-6 : f32
    %19 = vector.broadcast %cst_9 : f32 to vector<1x256xf32>
    %20 = arith.addf %16, %19 : vector<1x256xf32>
    %21 = math.rsqrt %20 : vector<1x256xf32>
    %22 = vector.broadcast %21 : vector<1x256xf32> to vector<8x256xf32>
    %23 = arith.mulf %18, %22 : vector<8x256xf32>
    %c0_10 = arith.constant 0 : index
    %c0_11 = arith.constant 0 : index
    %24 = vector.load %arg3[%c0_10, %c0_11] : memref<1x256xf32, #tpu.memory_space<vmem>>, vector<1x256xf32>
    %25 = vector.broadcast %24 : vector<1x256xf32> to vector<8x256xf32>
    %26 = arith.mulf %23, %25 : vector<8x256xf32>
    %c0_12 = arith.constant 0 : index
    %c0_13 = arith.constant 0 : index
    %27 = vector.load %arg4[%c0_12, %c0_13] : memref<1x256xf32, #tpu.memory_space<vmem>>, vector<1x256xf32>
    %28 = vector.broadcast %27 : vector<1x256xf32> to vector<8x256xf32>
    %29 = arith.addf %26, %28 : vector<8x256xf32>
    %cst_14 = arith.constant 0.000000e+00 : f32
    %30 = vector.broadcast %cst_14 : f32 to vector<8x256xf32>
    %31 = arith.cmpf ogt, %29, %30 : vector<8x256xf32>
    %cst_15 = arith.constant 0.00999999977 : f32
    %32 = vector.broadcast %cst_15 : f32 to vector<8x256xf32>
    %33 = arith.mulf %32, %29 : vector<8x256xf32>
    %34 = arith.select %31, %29, %33 : vector<8x256xi1>, vector<8x256xf32>
    %c0_16 = arith.constant 0 : index
    %c0_17 = arith.constant 0 : index
    %35 = vector.load %arg8[%c0_16, %c0_17] : memref<8x256xf32, #tpu.memory_space<vmem>>, vector<8x256xf32>
    tpu.vector_store %arg8[%c0_16, %c0_17], %34 {strides = array<i32>} : memref<8x256xf32, #tpu.memory_space<vmem>>, vector<8x256xf32>,
    %c0_18 = arith.constant 0 : index
    %c0_19 = arith.constant 0 : index
    %36 = vector.load %arg5[%c0_18, %c0_19] : memref<8x1204xf32, #tpu.memory_space<vmem>>, vector<8x1204xf32>
    %c0_20 = arith.constant 0 : index
    %c0_21 = arith.constant 0 : index
    %37 = vector.load %arg6[%c0_20, %c0_21] : memref<1204x128xf32, #tpu.memory_space<vmem>>, vector<1204x128xf32>
    %cst_22 = arith.constant dense<0.000000e+00> : vector<8x128xf32>
    %38 = tpu.matmul %36, %37, %cst_22 {dimension_numbers = #tpu.dot_dimension_numbers<[1], [0], [0], [1], [0, 0, 1, 1], [], []>} : vector<8x1204xf32>, vector<1204x128xf32>, vector<8x128xf32> -> vector<8x128xf32>
    %c0_23 = arith.constant 0 : index
    %c0_24 = arith.constant 0 : index
    %39 = vector.load %arg7[%c0_23, %c0_24] : memref<1x128xf32, #tpu.memory_space<vmem>>, vector<1x128xf32>
    %40 = vector.broadcast %39 : vector<1x128xf32> to vector<8x128xf32>
    %41 = arith.addf %38, %40 : vector<8x128xf32>
    %c0_25 = arith.constant 0 : index
    %c0_26 = arith.constant 0 : index
    %42 = vector.load %arg9[%c0_25, %c0_26] : memref<8x128xf32, #tpu.memory_space<vmem>>, vector<8x128xf32>
    tpu.vector_store %arg9[%c0_25, %c0_26], %41 {strides = array<i32>} : memref<8x128xf32, #tpu.memory_space<vmem>>, vector<8x128xf32>,
    return
  }
}

</mosaic_0001>

<llo_original>
// kernel: tpu_custom_call.1
$region0: #{tpu_custom_call.1}
  #allocation0 [shape = 'u32[]', space=smem, size = 0x4, offset = 0x4, fixed_abs, tag = 'smem constant byte address 0x4 - core index']
  #allocation1 [shape = 'u32[144,128]{1,0:T(1,128)}', space=vmem, size = 0x12000, scoped, tag = 'internal scratch']
  %s0 = inlined_call_operand.hbm [shape: f32[8,32], index: 0, kind: input, shape index: {}]
  %s1 = inlined_call_operand.hbm [shape: f32[32,256], index: 1, kind: input, shape index: {}]
  %s2 = inlined_call_operand.vmem [shape: f32[1,256], index: 2, kind: input, shape index: {}]
  %s3 = inlined_call_operand.vmem [shape: f32[1,256], index: 3, kind: input, shape index: {}]
  %s4 = inlined_call_operand.vmem [shape: f32[1,256], index: 4, kind: input, shape index: {}]
  %s5 = inlined_call_operand.hbm [shape: f32[8,1204], index: 5, kind: input, shape index: {}]
  %s6 = inlined_call_operand.hbm [shape: f32[1204,128], index: 6, kind: input, shape index: {}]
  %s7 = inlined_call_operand.vmem [shape: f32[1,128], index: 7, kind: input, shape index: {}]
  %s8 = inlined_call_operand.hbm [shape: f32[8,256], index: 8, kind: output, shape index: {0}]
  %s9 = inlined_call_operand.hbm [shape: f32[8,128], index: 9, kind: output, shape index: {1}]
  %10 = xla_tuple %s8, %s9
  %s11 = sld [smem:[#allocation0]]
  $region66: #{tpu_custom_call.1} parent=0
    _
  %s13 = ssub.s32 1, %s11
  %s14 = scalar_select 0, %s13, %s11
  $region1: #{tpu_custom_call.1} parent=0
    #allocation2 [shape = 'u8[4096]{0}', space=vmem, size = 0x1000, scoped, tag = 'input window, operand 0, single buffered']
    #allocation3 [shape = 's32[1]{0}', space=sflag, size = 0x4, scoped, tag = 'scoped memory for tpu_custom_call.1']
    #allocation4 [shape = 's32[1]{0}', space=sflag, size = 0x4, scoped, tag = 'scoped memory for tpu_custom_call.1']
    #allocation5 [shape = 'u8[32768]{0}', space=vmem, size = 0x8000, scoped, tag = 'input window, operand 1, single buffered']
    #allocation6 [shape = 's32[1]{0}', space=sflag, size = 0x4, scoped, tag = 'scoped memory for tpu_custom_call.1']
    #allocation7 [shape = 'u8[40960]{0}', space=vmem, size = 0xa000, scoped, tag = 'input window, operand 5, single buffered']
    #allocation8 [shape = 'u8[618496]{0}', space=vmem, size = 0x97000, scoped, tag = 'input window, operand 6, single buffered']
    #allocation9 [shape = 's32[1]{0}', space=sflag, size = 0x4, scoped, tag = 'scoped memory for tpu_custom_call.1']
    #allocation10 [shape = 'u8[8192]{0}', space=vmem, size = 0x2000, scoped, tag = 'output window, operand 0, single buffered']
    #allocation11 [shape = 'u8[4096]{0}', space=vmem, size = 0x1000, scoped, tag = 'output window, operand 1, single buffered']
    #allocation12 [shape = 's32[1]{0}', space=sflag, size = 0x4, scoped, tag = 'scoped memory for tpu_custom_call.1']
    %15 = vsyncpa [#allocation3], 0
    %16 = vsyncpa [#allocation6], 0
    %17 = vsyncpa [#allocation9], 0
    %18 = vsyncpa [#allocation4], 0
    %19 = vsyncpa [#allocation12], 0
    // Predicated region
    $region2: #{tpu_custom_call.1} parent=1 // pred_check
      _
    $region3: #{tpu_custom_call.1} parent=1 // pred_check_branch
      %21 = sbr.rel (0) target = $region5
    $region4: #{tpu_custom_call.1} parent=1 // pred_region
      %s23 = ssub.s32 128, 128
      %24 = vsyncadd [#allocation3], %s23
      %s26 = sshll.u32 [#allocation2], 4
      %s27 = int_to_ptr.vmem [resolvable:$true] %s26
      %29 = dma.hbm_to_vmem [thread:$0]  %s0, 128, %s27, [#allocation3]
    $region5: #{tpu_custom_call.1} parent=1 // pred_fallthru
      _
    // Predicated region
    $region6: #{tpu_custom_call.1} parent=1 // pred_check
      _
    $region7: #{tpu_custom_call.1} parent=1 // pred_check_branch
      %31 = sbr.rel (0) target = $region9
    $region8: #{tpu_custom_call.1} parent=1 // pred_region
      %s33 = ssub.s32 1024, 1024
      %34 = vsyncadd [#allocation6], %s33
      %s35 = sshll.u32 [#allocation5], 4
      %s36 = int_to_ptr.vmem [resolvable:$true] %s35
      %41 = dma.hbm_to_vmem [thread:$0]  %s1, 1024, %s36, [#allocation6], 256, 256, 16
    $region9: #{tpu_custom_call.1} parent=1 // pred_fallthru
      _
    // Predicated region
    $region10: #{tpu_custom_call.1} parent=1 // pred_check
      _
    $region11: #{tpu_custom_call.1} parent=1 // pred_check_branch
      %43 = sbr.rel (0) target = $region13
    $region12: #{tpu_custom_call.1} parent=1 // pred_region
      _
    $region13: #{tpu_custom_call.1} parent=1 // pred_fallthru
      _
    // Predicated region
    $region14: #{tpu_custom_call.1} parent=1 // pred_check
      _
    $region15: #{tpu_custom_call.1} parent=1 // pred_check_branch
      %45 = sbr.rel (0) target = $region17
    $region16: #{tpu_custom_call.1} parent=1 // pred_region
      _
    $region17: #{tpu_custom_call.1} parent=1 // pred_fallthru
      _
    // Predicated region
    $region18: #{tpu_custom_call.1} parent=1 // pred_check
      _
    $region19: #{tpu_custom_call.1} parent=1 // pred_check_branch
      %47 = sbr.rel (0) target = $region21
    $region20: #{tpu_custom_call.1} parent=1 // pred_region
      _
    $region21: #{tpu_custom_call.1} parent=1 // pred_fallthru
      _
    // Predicated region
    $region22: #{tpu_custom_call.1} parent=1 // pred_check
      _
    $region23: #{tpu_custom_call.1} parent=1 // pred_check_branch
      %49 = sbr.rel (0) target = $region25
    $region24: #{tpu_custom_call.1} parent=1 // pred_region
      %s51 = ssub.s32 1280, 1280
      %52 = vsyncadd [#allocation6], %s51
      %s54 = sshll.u32 [#allocation7], 4
      %s55 = int_to_ptr.vmem [resolvable:$true] %s54
      %57 = dma.hbm_to_vmem [thread:$0]  %s5, 1280, %s55, [#allocation6]
    $region25: #{tpu_custom_call.1} parent=1 // pred_fallthru
      _
    // Predicated region
    $region26: #{tpu_custom_call.1} parent=1 // pred_check
      _
    $region27: #{tpu_custom_call.1} parent=1 // pred_check_branch
      %59 = sbr.rel (0) target = $region29
    $region28: #{tpu_custom_call.1} parent=1 // pred_region
      %s61 = ssub.s32 19328, 19328
      %62 = vsyncadd [#allocation9], %s61
      %s63 = sshll.u32 [#allocation8], 4
      %s64 = int_to_ptr.vmem [resolvable:$true] %s63
      %69 = dma.hbm_to_vmem [thread:$0]  %s6, 19328, %s64, [#allocation9], 128, 128, 8
    $region29: #{tpu_custom_call.1} parent=1 // pred_fallthru
      _
    // Predicated region
    $region30: #{tpu_custom_call.1} parent=1 // pred_check
      _
    $region31: #{tpu_custom_call.1} parent=1 // pred_check_branch
      %71 = sbr.rel (0) target = $region33
    $region32: #{tpu_custom_call.1} parent=1 // pred_region
      _
    $region33: #{tpu_custom_call.1} parent=1 // pred_fallthru
      _
    // Predicated region
    $region34: #{tpu_custom_call.1} parent=1 // pred_check
      _
    $region35: #{tpu_custom_call.1} parent=1 // pred_check_branch
      %73 = sbr.rel (0) target = $region37
    $region36: #{tpu_custom_call.1} parent=1 // pred_region
      %74 = dma.done [#allocation3], 128
    $region37: #{tpu_custom_call.1} parent=1 // pred_fallthru
      _
    // Predicated region
    $region38: #{tpu_custom_call.1} parent=1 // pred_check
      _
    $region39: #{tpu_custom_call.1} parent=1 // pred_check_branch
      %76 = sbr.rel (0) target = $region41
    $region40: #{tpu_custom_call.1} parent=1 // pred_region
      %77 = dma.done [#allocation6], 1024
    $region41: #{tpu_custom_call.1} parent=1 // pred_fallthru
      _
    // Predicated region
    $region42: #{tpu_custom_call.1} parent=1 // pred_check
      _
    $region43: #{tpu_custom_call.1} parent=1 // pred_check_branch
      %79 = sbr.rel (0) target = $region45
    $region44: #{tpu_custom_call.1} parent=1 // pred_region
      %80 = dma.done [#allocation6], 1280
    $region45: #{tpu_custom_call.1} parent=1 // pred_fallthru
      _
    // Predicated region
    $region46: #{tpu_custom_call.1} parent=1 // pred_check
      _
    $region47: #{tpu_custom_call.1} parent=1 // pred_check_branch
      %82 = sbr.rel (0) target = $region49
    $region48: #{tpu_custom_call.1} parent=1 // pred_region
      %83 = dma.done [#allocation9], 19328
    $region49: #{tpu_custom_call.1} parent=1 // pred_fallthru
      _
    %v84 = vld [vmem:[#allocation2] sm:$0xff]
    %v85 = vld [vmem:[#allocation5] sm:$0xff]
    %v86 = vld [vmem:[#allocation5 + $0x8] sm:$0xff]
    %v87 = vld [vmem:[#allocation5 + $0x10] sm:$0xff]
    %v88 = vld [vmem:[#allocation5 + $0x18] sm:$0xff]
    %v89 = vld [vmem:[#allocation5 + $0x20] sm:$0xff]
    %v90 = vld [vmem:[#allocation5 + $0x28] sm:$0xff]
    %v91 = vld [vmem:[#allocation5 + $0x30] sm:$0xff]
    %v92 = vld [vmem:[#allocation5 + $0x38] sm:$0xff]
    %v93 = vld [vmem:[%s2] sm:$0x3]
    %v95 = vlaneseq
    %v96 = vshrl.u32 %v95, 7
    %v97 = vsub.s32 0, %v96
    %v98 = vrot.slane %v93, %v97
    %v99 = vlaneseq
    %v100 = vshrl.u32 %v99, 7
    %v101 = vsub.s32 1, %v100
    %v102 = vrot.slane %v93, %v101
    %vm105 = vcmask 261120
    %v107 = vsel %vm105, %v84, 0
    %109 = vmatprep.subr.mxu0 0.0
    %110 = vmatpush1.msra.mxu0 0.0
    %111 = vmatprep.subr.mxu0 0.0
    %112 = vmatpush1.msra.mxu0 0.0
    %113 = vmatprep.subr.mxu0 0.0
    %114 = vmatpush1.msra.mxu0 0.0
    %115 = vmatprep.subr.mxu0 0.0
    %116 = vmatpush1.msra.mxu0 0.0
    %117 = vmatprep.subr.mxu0 0.0
    %118 = vmatpush1.msra.mxu0 0.0
    %119 = vmatprep.subr.mxu0 0.0
    %120 = vmatpush1.msra.mxu0 0.0
    %121 = vmatprep.subr.mxu0 0.0
    %122 = vmatpush1.msra.mxu0 0.0
    %123 = vmatprep.subr.mxu0 0.0
    %124 = vmatpush1.msra.mxu0 0.0
    %125 = vmatprep.subr.mxu0 0.0
    %126 = vmatpush1.msra.mxu0 0.0
    %127 = vmatprep.subr.mxu0 0.0
    %128 = vmatpush1.msra.mxu0 0.0
    %129 = vmatprep.subr.mxu0 0.0
    %130 = vmatpush1.msra.mxu0 0.0
    %131 = vmatprep.subr.mxu0 0.0
    %132 = vmatpush1.msra.mxu0 0.0
    %133 = vmatprep.subr.mxu0 %v92
    %134 = vmatpush1.msra.mxu0 %v91
    %135 = vmatprep.subr.mxu0 %v90
    %136 = vmatpush1.msra.mxu0 %v89
    %137 = vmatprep.subr.mxu0 %v88
    %138 = vmatpush1.msra.mxu0 %v87
    %139 = vmatprep.subr.mxu0 %v86
    %140 = vmatpush1.msra.mxu0 %v85
    %141 = vmatprep.subr.mxu0 0.0
    %142 = vmatpush2.msra.mxu0 0.0
    %143 = vmatprep.subr.mxu0 0.0
    %144 = vmatpush2.msra.mxu0 0.0
    %145 = vmatprep.subr.mxu0 0.0
    %146 = vmatpush2.msra.mxu0 0.0
    %147 = vmatprep.subr.mxu0 0.0
    %148 = vmatpush2.msra.mxu0 0.0
    %149 = vmatprep.subr.mxu0 0.0
    %150 = vmatpush2.msra.mxu0 0.0
    %151 = vmatprep.subr.mxu0 0.0
    %152 = vmatpush2.msra.mxu0 0.0
    %153 = vmatprep.subr.mxu0 0.0
    %154 = vmatpush2.msra.mxu0 0.0
    %155 = vmatprep.subr.mxu0 0.0
    %156 = vmatpush2.msra.mxu0 0.0
    %157 = vmatprep.subr.mxu0 0.0
    %158 = vmatpush2.msra.mxu0 0.0
    %159 = vmatprep.subr.mxu0 0.0
    %160 = vmatpush2.msra.mxu0 0.0
    %161 = vmatprep.subr.mxu0 0.0
    %162 = vmatpush2.msra.mxu0 0.0
    %163 = vmatprep.subr.mxu0 0.0
    %164 = vmatpush2.msra.mxu0 0.0
    %165 = vmatprep.subr.mxu0 0.0
    %166 = vmatpush2.msra.mxu0 0.0
    %167 = vmatprep.subr.mxu0 0.0
    %168 = vmatpush2.msra.mxu0 0.0
    %169 = vmatprep.subr.mxu0 0.0
    %170 = vmatpush2.msra.mxu0 0.0
    %171 = vmatprep.subr.mxu0 0.0
    %172 = vmatpush2.msra.mxu0 0.0
    %173 = vmatprep.mubr.f32.mxu0 0.0
    %174 = vmatmul.mubr.f32.gmra.mxu0 %v107
    %v175 = vpop.f32.mrf.mxu0
    %v176 = vadd.f32 %v98, %v175
    %v177 = vpop.f32.mrf.mxu0
    %v178 = vadd.f32 %v102, %v177
    %179 = vdwg.mxu0
    %v180 = vrot.slane %v176, 4
    %v181 = vadd.f32 %v176, %v180
    %v182 = vrot.slane %v181, 2
    %v183 = vadd.f32 %v181, %v182
    %v184 = vrot.slane %v183, 1
    %v185 = vadd.f32 %v183, %v184
    %v186 = vrot.slane %v178, 4
    %v187 = vadd.f32 %v178, %v186
    %v188 = vrot.slane %v187, 2
    %v189 = vadd.f32 %v187, %v188
    %v190 = vrot.slane %v189, 1
    %v191 = vadd.f32 %v189, %v190
    %v192 = vmul.f32 %v176, %v176
    %v193 = vmul.f32 %v178, %v178
    %v194 = vrot.slane %v192, 4
    %v195 = vadd.f32 %v192, %v194
    %v196 = vrot.slane %v195, 2
    %v197 = vadd.f32 %v195, %v196
    %v198 = vrot.slane %v197, 1
    %v199 = vadd.f32 %v197, %v198
    %v200 = vrot.slane %v193, 4
    %v201 = vadd.f32 %v193, %v200
    %v202 = vrot.slane %v201, 2
    %v203 = vadd.f32 %v201, %v202
    %v204 = vrot.slane %v203, 1
    %v205 = vadd.f32 %v203, %v204
    %v206 = vmul.f32 %v185, 0.125
    %v207 = vmul.f32 %v191, 0.125
    %v208 = vmul.f32 %v199, 0.125
    %v209 = vmul.f32 %v205, 0.125
    %v210 = vmul.f32 %v206, %v206
    %v211 = vmul.f32 %v207, %v207
    %v212 = vsub.f32 %v208, %v210
    %v213 = vsub.f32 %v209, %v211
    %v214 = vsub.f32 %v176, %v206
    %v215 = vsub.f32 %v178, %v207
    %v216 = vadd.f32 %v212, 1e-05
    %v217 = vadd.f32 %v213, 1e-05
    %v218 = vrsqrt.pop %v216
    %v219 = vrsqrt.pop %v217
    %v220 = vmul.f32 %v214, %v218
    %v221 = vmul.f32 %v215, %v219
    %v222 = vld [vmem:[%s3] sm:$0x3]
    %v224 = vlaneseq
    %v225 = vshrl.u32 %v224, 7
    %v226 = vsub.s32 0, %v225
    %v227 = vrot.slane %v222, %v226
    %v228 = vlaneseq
    %v229 = vshrl.u32 %v228, 7
    %v230 = vsub.s32 1, %v229
    %v231 = vrot.slane %v222, %v230
    %v234 = vmul.f32 %v220, %v227
    %v235 = vmul.f32 %v221, %v231
    %v236 = vld [vmem:[%s4] sm:$0x3]
    %v238 = vlaneseq
    %v239 = vshrl.u32 %v238, 7
    %v240 = vsub.s32 0, %v239
    %v241 = vrot.slane %v236, %v240
    %v242 = vlaneseq
    %v243 = vshrl.u32 %v242, 7
    %v244 = vsub.s32 1, %v243
    %v245 = vrot.slane %v236, %v244
    %v248 = vadd.f32 %v234, %v241
    %v249 = vadd.f32 %v235, %v245
    %vm250 = vcmp.gt.f32.partialorder %v248, 0.0
    %vm251 = vcmp.gt.f32.partialorder %v249, 0.0
    %v252 = vmul.f32 %v248, 0.01
    %v253 = vmul.f32 %v249, 0.01
    %v254 = vsel %vm250, %v248, %v252
    %v255 = vsel %vm251, %v249, %v253
    %256 = vst [vmem:[#allocation10] sm:$0xff] %v254
    %257 = vst [vmem:[#allocation10 + $0x8] sm:$0xff] %v255
    %v258 = vld [vmem:[#allocation7] sm:$0xff]
    %v259 = vld [vmem:[#allocation7 + $0x8] sm:$0xff]
    %v260 = vld [vmem:[#allocation7 + $0x10] sm:$0xff]
    %v261 = vld [vmem:[#allocation7 + $0x18] sm:$0xff]
    %v262 = vld [vmem:[#allocation7 + $0x20] sm:$0xff]
    %v263 = vld [vmem:[#allocation7 + $0x28] sm:$0xff]
    %v264 = vld [vmem:[#allocation7 + $0x30] sm:$0xff]
    %v265 = vld [vmem:[#allocation7 + $0x38] sm:$0xff]
    %v266 = vld [vmem:[#allocation7 + $0x40] sm:$0xff]
    %v267 = vld [vmem:[#allocation7 + $0x48] sm:$0xff]
    %v268 = vld [vmem:[#allocation8] sm:$0xff]
    %v269 = vld [vmem:[#allocation8 + $0x8] sm:$0xff]
    %v270 = vld [vmem:[#allocation8 + $0x10] sm:$0xff]
    %v271 = vld [vmem:[#allocation8 + $0x18] sm:$0xff]
    %v272 = vld [vmem:[#allocation8 + $0x20] sm:$0xff]
    %v273 = vld [vmem:[#allocation8 + $0x28] sm:$0xff]
    %v274 = vld [vmem:[#allocation8 + $0x30] sm:$0xff]
    %v275 = vld [vmem:[#allocation8 + $0x38] sm:$0xff]
    %v276 = vld [vmem:[#allocation8 + $0x40] sm:$0xff]
    %v277 = vld [vmem:[#allocation8 + $0x48] sm:$0xff]
    %v278 = vld [vmem:[#allocation8 + $0x50] sm:$0xff]
    %v279 = vld [vmem:[#allocation8 + $0x58] sm:$0xff]
    %v280 = vld [vmem:[#allocation8 + $0x60] sm:$0xff]
    %v281 = vld [vmem:[#allocation8 + $0x68] sm:$0xff]
    %v282 = vld [vmem:[#allocation8 + $0x70] sm:$0xff]
    %v283 = vld [vmem:[#allocation8 + $0x78] sm:$0xff]
    %v284 = vld [vmem:[#allocation8 + $0x80] sm:$0xff]
    %v285 = vld [vmem:[#allocation8 + $0x88] sm:$0xff]
    %v286 = vld [vmem:[#allocation8 + $0x90] sm:$0xff]
    %v287 = vld [vmem:[#allocation8 + $0x98] sm:$0xff]
    %v288 = vld [vmem:[#allocation8 + $0xa0] sm:$0xff]
    %v289 = vld [vmem:[#allocation8 + $0xa8] sm:$0xff]
    %v290 = vld [vmem:[#allocation8 + $0xb0] sm:$0xff]
    %v291 = vld [vmem:[#allocation8 + $0xb8] sm:$0xff]
    %v292 = vld [vmem:[#allocation8 + $0xc0] sm:$0xff]
    %v293 = vld [vmem:[#allocation8 + $0xc8] sm:$0xff]
    %v294 = vld [vmem:[#allocation8 + $0xd0] sm:$0xff]
    %v295 = vld [vmem:[#allocation8 + $0xd8] sm:$0xff]
    %v296 = vld [vmem:[#allocation8 + $0xe0] sm:$0xff]
    %v297 = vld [vmem:[#allocation8 + $0xe8] sm:$0xff]
    %v298 = vld [vmem:[#allocation8 + $0xf0] sm:$0xff]
    %v299 = vld [vmem:[#allocation8 + $0xf8] sm:$0xff]
    %v300 = vld [vmem:[#allocation8 + $0x100] sm:$0xff]
    %v301 = vld [vmem:[#allocation8 + $0x108] sm:$0xff]
    %v302 = vld [vmem:[#allocation8 + $0x110] sm:$0xff]
    %v303 = vld [vmem:[#allocation8 + $0x118] sm:$0xff]
    %v304 = vld [vmem:[#allocation8 + $0x120] sm:$0xff]
    %v305 = vld [vmem:[#allocation8 + $0x128] sm:$0xff]
    %v306 = vld [vmem:[#allocation8 + $0x130] sm:$0xff]
    %v307 = vld [vmem:[#allocation8 + $0x138] sm:$0xff]
    %v308 = vld [vmem:[#allocation8 + $0x140] sm:$0xff]
    %v309 = vld [vmem:[#allocation8 + $0x148] sm:$0xff]
    %v310 = vld [vmem:[#allocation8 + $0x150] sm:$0xff]
    %v311 = vld [vmem:[#allocation8 + $0x158] sm:$0xff]
    %v312 = vld [vmem:[#allocation8 + $0x160] sm:$0xff]
    %v313 = vld [vmem:[#allocation8 + $0x168] sm:$0xff]
    %v314 = vld [vmem:[#allocation8 + $0x170] sm:$0xff]
    %v315 = vld [vmem:[#allocation8 + $0x178] sm:$0xff]
    %v316 = vld [vmem:[#allocation8 + $0x180] sm:$0xff]
    %v317 = vld [vmem:[#allocation8 + $0x188] sm:$0xff]
    %v318 = vld [vmem:[#allocation8 + $0x190] sm:$0xff]
    %v319 = vld [vmem:[#allocation8 + $0x198] sm:$0xff]
    %v320 = vld [vmem:[#allocation8 + $0x1a0] sm:$0xff]
    %v321 = vld [vmem:[#allocation8 + $0x1a8] sm:$0xff]
    %v322 = vld [vmem:[#allocation8 + $0x1b0] sm:$0xff]
    %v323 = vld [vmem:[#allocation8 + $0x1b8] sm:$0xff]
    %v324 = vld [vmem:[#allocation8 + $0x1c0] sm:$0xff]
    %v325 = vld [vmem:[#allocation8 + $0x1c8] sm:$0xff]
    %v326 = vld [vmem:[#allocation8 + $0x1d0] sm:$0xff]
    %v327 = vld [vmem:[#allocation8 + $0x1d8] sm:$0xff]
    %v328 = vld [vmem:[#allocation8 + $0x1e0] sm:$0xff]
    %v329 = vld [vmem:[#allocation8 + $0x1e8] sm:$0xff]
    %v330 = vld [vmem:[#allocation8 + $0x1f0] sm:$0xff]
    %v331 = vld [vmem:[#allocation8 + $0x1f8] sm:$0xff]
    %v332 = vld [vmem:[#allocation8 + $0x200] sm:$0xff]
    %v333 = vld [vmem:[#allocation8 + $0x208] sm:$0xff]
    %v334 = vld [vmem:[#allocation8 + $0x210] sm:$0xff]
    %v335 = vld [vmem:[#allocation8 + $0x218] sm:$0xff]
    %v336 = vld [vmem:[#allocation8 + $0x220] sm:$0xff]
    %v337 = vld [vmem:[#allocation8 + $0x228] sm:$0xff]
    %v338 = vld [vmem:[#allocation8 + $0x230] sm:$0xff]
    %v339 = vld [vmem:[#allocation8 + $0x238] sm:$0xff]
    %v340 = vld [vmem:[#allocation8 + $0x240] sm:$0xff]
    %v341 = vld [vmem:[#allocation8 + $0x248] sm:$0xff]
    %v342 = vld [vmem:[#allocation8 + $0x250] sm:$0xff]
    %v343 = vld [vmem:[#allocation8 + $0x258] sm:$0xff]
    %v344 = vld [vmem:[#allocation8 + $0x260] sm:$0xff]
    %v345 = vld [vmem:[#allocation8 + $0x268] sm:$0xff]
    %v346 = vld [vmem:[#allocation8 + $0x270] sm:$0xff]
    %v347 = vld [vmem:[#allocation8 + $0x278] sm:$0xff]
    %v348 = vld [vmem:[#allocation8 + $0x280] sm:$0xff]
    %v349 = vld [vmem:[#allocation8 + $0x288] sm:$0xff]
    %v350 = vld [vmem:[#allocation8 + $0x290] sm:$0xff]
    %v351 = vld [vmem:[#allocation8 + $0x298] sm:$0xff]
    %v352 = vld [vmem:[#allocation8 + $0x2a0] sm:$0xff]
    %v353 = vld [vmem:[#allocation8 + $0x2a8] sm:$0xff]
    %v354 = vld [vmem:[#allocation8 + $0x2b0] sm:$0xff]
    %v355 = vld [vmem:[#allocation8 + $0x2b8] sm:$0xff]
    %v356 = vld [vmem:[#allocation8 + $0x2c0] sm:$0xff]
    %v357 = vld [vmem:[#allocation8 + $0x2c8] sm:$0xff]
    %v358 = vld [vmem:[#allocation8 + $0x2d0] sm:$0xff]
    %v359 = vld [vmem:[#allocation8 + $0x2d8] sm:$0xff]
    %v360 = vld [vmem:[#allocation8 + $0x2e0] sm:$0xff]
    %v361 = vld [vmem:[#allocation8 + $0x2e8] sm:$0xff]
    %v362 = vld [vmem:[#allocation8 + $0x2f0] sm:$0xff]
    %v363 = vld [vmem:[#allocation8 + $0x2f8] sm:$0xff]
    %v364 = vld [vmem:[#allocation8 + $0x300] sm:$0xff]
    %v365 = vld [vmem:[#allocation8 + $0x308] sm:$0xff]
    %v366 = vld [vmem:[#allocation8 + $0x310] sm:$0xff]
    %v367 = vld [vmem:[#allocation8 + $0x318] sm:$0xff]
    %v368 = vld [vmem:[#allocation8 + $0x320] sm:$0xff]
    %v369 = vld [vmem:[#allocation8 + $0x328] sm:$0xff]
    %v370 = vld [vmem:[#allocation8 + $0x330] sm:$0xff]
    %v371 = vld [vmem:[#allocation8 + $0x338] sm:$0xff]
    %v372 = vld [vmem:[#allocation8 + $0x340] sm:$0xff]
    %v373 = vld [vmem:[#allocation8 + $0x348] sm:$0xff]
    %v374 = vld [vmem:[#allocation8 + $0x350] sm:$0xff]
    %v375 = vld [vmem:[#allocation8 + $0x358] sm:$0xff]
    %v376 = vld [vmem:[#allocation8 + $0x360] sm:$0xff]
    %v377 = vld [vmem:[#allocation8 + $0x368] sm:$0xff]
    %v378 = vld [vmem:[#allocation8 + $0x370] sm:$0xff]
    %v379 = vld [vmem:[#allocation8 + $0x378] sm:$0xff]
    %v380 = vld [vmem:[#allocation8 + $0x380] sm:$0xff]
    %v381 = vld [vmem:[#allocation8 + $0x388] sm:$0xff]
    %v382 = vld [vmem:[#allocation8 + $0x390] sm:$0xff]
    %v383 = vld [vmem:[#allocation8 + $0x398] sm:$0xff]
    %v384 = vld [vmem:[#allocation8 + $0x3a0] sm:$0xff]
    %v385 = vld [vmem:[#allocation8 + $0x3a8] sm:$0xff]
    %v386 = vld [vmem:[#allocation8 + $0x3b0] sm:$0xff]
    %v387 = vld [vmem:[#allocation8 + $0x3b8] sm:$0xff]
    %v388 = vld [vmem:[#allocation8 + $0x3c0] sm:$0xff]
    %v389 = vld [vmem:[#allocation8 + $0x3c8] sm:$0xff]
    %v390 = vld [vmem:[#allocation8 + $0x3d0] sm:$0xff]
    %v391 = vld [vmem:[#allocation8 + $0x3d8] sm:$0xff]
    %v392 = vld [vmem:[#allocation8 + $0x3e0] sm:$0xff]
    %v393 = vld [vmem:[#allocation8 + $0x3e8] sm:$0xff]
    %v394 = vld [vmem:[#allocation8 + $0x3f0] sm:$0xff]
    %v395 = vld [vmem:[#allocation8 + $0x3f8] sm:$0xff]
    %v396 = vld [vmem:[#allocation8 + $0x400] sm:$0xff]
    %v397 = vld [vmem:[#allocation8 + $0x408] sm:$0xff]
    %v398 = vld [vmem:[#allocation8 + $0x410] sm:$0xff]
    %v399 = vld [vmem:[#allocation8 + $0x418] sm:$0xff]
    %v400 = vld [vmem:[#allocation8 + $0x420] sm:$0xff]
    %v401 = vld [vmem:[#allocation8 + $0x428] sm:$0xff]
    %v402 = vld [vmem:[#allocation8 + $0x430] sm:$0xff]
    %v403 = vld [vmem:[#allocation8 + $0x438] sm:$0xff]
    %v404 = vld [vmem:[#allocation8 + $0x440] sm:$0xff]
    %v405 = vld [vmem:[#allocation8 + $0x448] sm:$0xff]
    %v406 = vld [vmem:[#allocation8 + $0x450] sm:$0xff]
    %v407 = vld [vmem:[#allocation8 + $0x458] sm:$0xff]
    %v408 = vld [vmem:[#allocation8 + $0x460] sm:$0xff]
    %v409 = vld [vmem:[#allocation8 + $0x468] sm:$0xff]
    %v410 = vld [vmem:[#allocation8 + $0x470] sm:$0xff]
    %v411 = vld [vmem:[#allocation8 + $0x478] sm:$0xff]
    %v412 = vld [vmem:[#allocation8 + $0x480] sm:$0xff]
    %v413 = vld [vmem:[#allocation8 + $0x488] sm:$0xff]
    %v414 = vld [vmem:[#allocation8 + $0x490] sm:$0xff]
    %v415 = vld [vmem:[#allocation8 + $0x498] sm:$0xff]
    %v416 = vld [vmem:[#allocation8 + $0x4a0] sm:$0xff]
    %v417 = vld [vmem:[#allocation8 + $0x4a8] sm:$0xff]
    %v418 = vld [vmem:[#allocation8 + $0x4b0] sm:$0xf]
    %v419 = vld [vmem:[%s7] sm:$0x1]
    %v421 = vlaneseq
    %v422 = vshrl.u32 %v421, 7
    %v423 = vsub.s32 0, %v422
    %v424 = vrot.slane %v419, %v423
    %vm426 = vcmask 424960
    %v428 = vsel %vm426, %v267, 0
    %vm430 = vcmask 1043456
    %v432 = vsel %vm430, %v418, 0
    %434 = vmatprep.subr.mxu0 0.0
    %435 = vmatpush1.msra.mxu0 %v283
    %436 = vmatprep.subr.mxu0 0.0
    %437 = vmatpush1.msra.mxu0 %v282
    %438 = vmatprep.subr.mxu0 0.0
    %439 = vmatpush1.msra.mxu0 %v281
    %440 = vmatprep.subr.mxu0 0.0
    %441 = vmatpush1.msra.mxu0 %v280
    %442 = vmatprep.subr.mxu0 0.0
    %443 = vmatpush1.msra.mxu0 %v279
    %444 = vmatprep.subr.mxu0 0.0
    %445 = vmatpush1.msra.mxu0 %v278
    %446 = vmatprep.subr.mxu0 0.0
    %447 = vmatpush1.msra.mxu0 %v277
    %448 = vmatprep.subr.mxu0 0.0
    %449 = vmatpush1.msra.mxu0 %v276
    %450 = vmatprep.subr.mxu0 0.0
    %451 = vmatpush1.msra.mxu0 %v275
    %452 = vmatprep.subr.mxu0 0.0
    %453 = vmatpush1.msra.mxu0 %v274
    %454 = vmatprep.subr.mxu0 0.0
    %455 = vmatpush1.msra.mxu0 %v273
    %456 = vmatprep.subr.mxu0 0.0
    %457 = vmatpush1.msra.mxu0 %v272
    %458 = vmatprep.subr.mxu0 0.0
    %459 = vmatpush1.msra.mxu0 %v271
    %460 = vmatprep.subr.mxu0 0.0
    %461 = vmatpush1.msra.mxu0 %v270
    %462 = vmatprep.subr.mxu0 0.0
    %463 = vmatpush1.msra.mxu0 %v269
    %464 = vmatprep.subr.mxu0 0.0
    %465 = vmatpush1.msra.mxu0 %v268
    %466 = vmatprep.subr.mxu0 0.0
    %467 = vmatpush2.msra.mxu0 %v299
    %468 = vmatprep.subr.mxu0 0.0
    %469 = vmatpush2.msra.mxu0 %v298
    %470 = vmatprep.subr.mxu0 0.0
    %471 = vmatpush2.msra.mxu0 %v297
    %472 = vmatprep.subr.mxu0 0.0
    %473 = vmatpush2.msra.mxu0 %v296
    %474 = vmatprep.subr.mxu0 0.0
    %475 = vmatpush2.msra.mxu0 %v295
    %476 = vmatprep.subr.mxu0 0.0
    %477 = vmatpush2.msra.mxu0 %v294
    %478 = vmatprep.subr.mxu0 0.0
    %479 = vmatpush2.msra.mxu0 %v293
    %480 = vmatprep.subr.mxu0 0.0
    %481 = vmatpush2.msra.mxu0 %v292
    %482 = vmatprep.subr.mxu0 0.0
    %483 = vmatpush2.msra.mxu0 %v291
    %484 = vmatprep.subr.mxu0 0.0
    %485 = vmatpush2.msra.mxu0 %v290
    %486 = vmatprep.subr.mxu0 0.0
    %487 = vmatpush2.msra.mxu0 %v289
    %488 = vmatprep.subr.mxu0 0.0
    %489 = vmatpush2.msra.mxu0 %v288
    %490 = vmatprep.subr.mxu0 0.0
    %491 = vmatpush2.msra.mxu0 %v287
    %492 = vmatprep.subr.mxu0 0.0
    %493 = vmatpush2.msra.mxu0 %v286
    %494 = vmatprep.subr.mxu0 0.0
    %495 = vmatpush2.msra.mxu0 %v285
    %496 = vmatprep.subr.mxu0 0.0
    %497 = vmatpush2.msra.mxu0 %v284
    %498 = vmatprep.mubr.f32.mxu0 %v259
    %499 = vmatmul.mubr.f32.gmra.mxu0 %v258
    %v500 = vpop.f32.mrf.mxu0
    %v501 = vadd.f32 %v424, %v500
    %v502 = vpop.f32.mrf.mxu0
    %503 = vdwg.mxu0
    %504 = vmatprep.subr.mxu0 0.0
    %505 = vmatpush1.msra.mxu0 %v315
    %506 = vmatprep.subr.mxu0 0.0
    %507 = vmatpush1.msra.mxu0 %v314
    %508 = vmatprep.subr.mxu0 0.0
    %509 = vmatpush1.msra.mxu0 %v313
    %510 = vmatprep.subr.mxu0 0.0
    %511 = vmatpush1.msra.mxu0 %v312
    %512 = vmatprep.subr.mxu0 0.0
    %513 = vmatpush1.msra.mxu0 %v311
    %514 = vmatprep.subr.mxu0 0.0
    %515 = vmatpush1.msra.mxu0 %v310
    %516 = vmatprep.subr.mxu0 0.0
    %517 = vmatpush1.msra.mxu0 %v309
    %518 = vmatprep.subr.mxu0 0.0
    %519 = vmatpush1.msra.mxu0 %v308
    %520 = vmatprep.subr.mxu0 0.0
    %521 = vmatpush1.msra.mxu0 %v307
    %522 = vmatprep.subr.mxu0 0.0
    %523 = vmatpush1.msra.mxu0 %v306
    %524 = vmatprep.subr.mxu0 0.0
    %525 = vmatpush1.msra.mxu0 %v305
    %526 = vmatprep.subr.mxu0 0.0
    %527 = vmatpush1.msra.mxu0 %v304
    %528 = vmatprep.subr.mxu0 0.0
    %529 = vmatpush1.msra.mxu0 %v303
    %530 = vmatprep.subr.mxu0 0.0
    %531 = vmatpush1.msra.mxu0 %v302
    %532 = vmatprep.subr.mxu0 0.0
    %533 = vmatpush1.msra.mxu0 %v301
    %534 = vmatprep.subr.mxu0 0.0
    %535 = vmatpush1.msra.mxu0 %v300
    %536 = vmatprep.subr.mxu0 0.0
    %537 = vmatpush2.msra.mxu0 %v331
    %538 = vmatprep.subr.mxu0 0.0
    %539 = vmatpush2.msra.mxu0 %v330
    %540 = vmatprep.subr.mxu0 0.0
    %541 = vmatpush2.msra.mxu0 %v329
    %542 = vmatprep.subr.mxu0 0.0
    %543 = vmatpush2.msra.mxu0 %v328
    %544 = vmatprep.subr.mxu0 0.0
    %545 = vmatpush2.msra.mxu0 %v327
    %546 = vmatprep.subr.mxu0 0.0
    %547 = vmatpush2.msra.mxu0 %v326
    %548 = vmatprep.subr.mxu0 0.0
    %549 = vmatpush2.msra.mxu0 %v325
    %550 = vmatprep.subr.mxu0 0.0
    %551 = vmatpush2.msra.mxu0 %v324
    %552 = vmatprep.subr.mxu0 0.0
    %553 = vmatpush2.msra.mxu0 %v323
    %554 = vmatprep.subr.mxu0 0.0
    %555 = vmatpush2.msra.mxu0 %v322
    %556 = vmatprep.subr.mxu0 0.0
    %557 = vmatpush2.msra.mxu0 %v321
    %558 = vmatprep.subr.mxu0 0.0
    %559 = vmatpush2.msra.mxu0 %v320
    %560 = vmatprep.subr.mxu0 0.0
    %561 = vmatpush2.msra.mxu0 %v319
    %562 = vmatprep.subr.mxu0 0.0
    %563 = vmatpush2.msra.mxu0 %v318
    %564 = vmatprep.subr.mxu0 0.0
    %565 = vmatpush2.msra.mxu0 %v317
    %566 = vmatprep.subr.mxu0 0.0
    %567 = vmatpush2.msra.mxu0 %v316
    %568 = vmatprep.mubr.f32.mxu0 %v261
    %569 = vmatmul.mubr.f32.gmra.mxu0 %v260
    %v570 = vpop.f32.mrf.mxu0
    %v571 = vadd.f32 %v501, %v570
    %v572 = vpop.f32.mrf.mxu0
    %573 = vdwg.mxu0
    %574 = vmatprep.subr.mxu0 0.0
    %575 = vmatpush1.msra.mxu0 %v347
    %576 = vmatprep.subr.mxu0 0.0
    %577 = vmatpush1.msra.mxu0 %v346
    %578 = vmatprep.subr.mxu0 0.0
    %579 = vmatpush1.msra.mxu0 %v345
    %580 = vmatprep.subr.mxu0 0.0
    %581 = vmatpush1.msra.mxu0 %v344
    %582 = vmatprep.subr.mxu0 0.0
    %583 = vmatpush1.msra.mxu0 %v343
    %584 = vmatprep.subr.mxu0 0.0
    %585 = vmatpush1.msra.mxu0 %v342
    %586 = vmatprep.subr.mxu0 0.0
    %587 = vmatpush1.msra.mxu0 %v341
    %588 = vmatprep.subr.mxu0 0.0
    %589 = vmatpush1.msra.mxu0 %v340
    %590 = vmatprep.subr.mxu0 0.0
    %591 = vmatpush1.msra.mxu0 %v339
    %592 = vmatprep.subr.mxu0 0.0
    %593 = vmatpush1.msra.mxu0 %v338
    %594 = vmatprep.subr.mxu0 0.0
    %595 = vmatpush1.msra.mxu0 %v337
    %596 = vmatprep.subr.mxu0 0.0
    %597 = vmatpush1.msra.mxu0 %v336
    %598 = vmatprep.subr.mxu0 0.0
    %599 = vmatpush1.msra.mxu0 %v335
    %600 = vmatprep.subr.mxu0 0.0
    %601 = vmatpush1.msra.mxu0 %v334
    %602 = vmatprep.subr.mxu0 0.0
    %603 = vmatpush1.msra.mxu0 %v333
    %604 = vmatprep.subr.mxu0 0.0
    %605 = vmatpush1.msra.mxu0 %v332
    %606 = vmatprep.subr.mxu0 0.0
    %607 = vmatpush2.msra.mxu0 %v363
    %608 = vmatprep.subr.mxu0 0.0
    %609 = vmatpush2.msra.mxu0 %v362
    %610 = vmatprep.subr.mxu0 0.0
    %611 = vmatpush2.msra.mxu0 %v361
    %612 = vmatprep.subr.mxu0 0.0
    %613 = vmatpush2.msra.mxu0 %v360
    %614 = vmatprep.subr.mxu0 0.0
    %615 = vmatpush2.msra.mxu0 %v359
    %616 = vmatprep.subr.mxu0 0.0
    %617 = vmatpush2.msra.mxu0 %v358
    %618 = vmatprep.subr.mxu0 0.0
    %619 = vmatpush2.msra.mxu0 %v357
    %620 = vmatprep.subr.mxu0 0.0
    %621 = vmatpush2.msra.mxu0 %v356
    %622 = vmatprep.subr.mxu0 0.0
    %623 = vmatpush2.msra.mxu0 %v355
    %624 = vmatprep.subr.mxu0 0.0
    %625 = vmatpush2.msra.mxu0 %v354
    %626 = vmatprep.subr.mxu0 0.0
    %627 = vmatpush2.msra.mxu0 %v353
    %628 = vmatprep.subr.mxu0 0.0
    %629 = vmatpush2.msra.mxu0 %v352
    %630 = vmatprep.subr.mxu0 0.0
    %631 = vmatpush2.msra.mxu0 %v351
    %632 = vmatprep.subr.mxu0 0.0
    %633 = vmatpush2.msra.mxu0 %v350
    %634 = vmatprep.subr.mxu0 0.0
    %635 = vmatpush2.msra.mxu0 %v349
    %636 = vmatprep.subr.mxu0 0.0
    %637 = vmatpush2.msra.mxu0 %v348
    %638 = vmatprep.mubr.f32.mxu0 %v263
    %639 = vmatmul.mubr.f32.gmra.mxu0 %v262
    %v640 = vpop.f32.mrf.mxu0
    %v641 = vadd.f32 %v571, %v640
    %v642 = vpop.f32.mrf.mxu0
    %643 = vdwg.mxu0
    %644 = vmatprep.subr.mxu0 0.0
    %645 = vmatpush1.msra.mxu0 %v379
    %646 = vmatprep.subr.mxu0 0.0
    %647 = vmatpush1.msra.mxu0 %v378
    %648 = vmatprep.subr.mxu0 0.0
    %649 = vmatpush1.msra.mxu0 %v377
    %650 = vmatprep.subr.mxu0 0.0
    %651 = vmatpush1.msra.mxu0 %v376
    %652 = vmatprep.subr.mxu0 0.0
    %653 = vmatpush1.msra.mxu0 %v375
    %654 = vmatprep.subr.mxu0 0.0
    %655 = vmatpush1.msra.mxu0 %v374
    %656 = vmatprep.subr.mxu0 0.0
    %657 = vmatpush1.msra.mxu0 %v373
    %658 = vmatprep.subr.mxu0 0.0
    %659 = vmatpush1.msra.mxu0 %v372
    %660 = vmatprep.subr.mxu0 0.0
    %661 = vmatpush1.msra.mxu0 %v371
    %662 = vmatprep.subr.mxu0 0.0
    %663 = vmatpush1.msra.mxu0 %v370
    %664 = vmatprep.subr.mxu0 0.0
    %665 = vmatpush1.msra.mxu0 %v369
    %666 = vmatprep.subr.mxu0 0.0
    %667 = vmatpush1.msra.mxu0 %v368
    %668 = vmatprep.subr.mxu0 0.0
    %669 = vmatpush1.msra.mxu0 %v367
    %670 = vmatprep.subr.mxu0 0.0
    %671 = vmatpush1.msra.mxu0 %v366
    %672 = vmatprep.subr.mxu0 0.0
    %673 = vmatpush1.msra.mxu0 %v365
    %674 = vmatprep.subr.mxu0 0.0
    %675 = vmatpush1.msra.mxu0 %v364
    %676 = vmatprep.subr.mxu0 0.0
    %677 = vmatpush2.msra.mxu0 %v395
    %678 = vmatprep.subr.mxu0 0.0
    %679 = vmatpush2.msra.mxu0 %v394
    %680 = vmatprep.subr.mxu0 0.0
    %681 = vmatpush2.msra.mxu0 %v393
    %682 = vmatprep.subr.mxu0 0.0
    %683 = vmatpush2.msra.mxu0 %v392
    %684 = vmatprep.subr.mxu0 0.0
    %685 = vmatpush2.msra.mxu0 %v391
    %686 = vmatprep.subr.mxu0 0.0
    %687 = vmatpush2.msra.mxu0 %v390
    %688 = vmatprep.subr.mxu0 0.0
    %689 = vmatpush2.msra.mxu0 %v389
    %690 = vmatprep.subr.mxu0 0.0
    %691 = vmatpush2.msra.mxu0 %v388
    %692 = vmatprep.subr.mxu0 0.0
    %693 = vmatpush2.msra.mxu0 %v387
    %694 = vmatprep.subr.mxu0 0.0
    %695 = vmatpush2.msra.mxu0 %v386
    %696 = vmatprep.subr.mxu0 0.0
    %697 = vmatpush2.msra.mxu0 %v385
    %698 = vmatprep.subr.mxu0 0.0
    %699 = vmatpush2.msra.mxu0 %v384
    %700 = vmatprep.subr.mxu0 0.0
    %701 = vmatpush2.msra.mxu0 %v383
    %702 = vmatprep.subr.mxu0 0.0
    %703 = vmatpush2.msra.mxu0 %v382
    %704 = vmatprep.subr.mxu0 0.0
    %705 = vmatpush2.msra.mxu0 %v381
    %706 = vmatprep.subr.mxu0 0.0
    %707 = vmatpush2.msra.mxu0 %v380
    %708 = vmatprep.mubr.f32.mxu0 %v265
    %709 = vmatmul.mubr.f32.gmra.mxu0 %v264
    %v710 = vpop.f32.mrf.mxu0
    %v711 = vadd.f32 %v641, %v710
    %v712 = vpop.f32.mrf.mxu0
    %713 = vdwg.mxu0
    %714 = vmatprep.subr.mxu0 0.0
    %715 = vmatpush1.msra.mxu0 %v411
    %716 = vmatprep.subr.mxu0 0.0
    %717 = vmatpush1.msra.mxu0 %v410
    %718 = vmatprep.subr.mxu0 0.0
    %719 = vmatpush1.msra.mxu0 %v409
    %720 = vmatprep.subr.mxu0 0.0
    %721 = vmatpush1.msra.mxu0 %v408
    %722 = vmatprep.subr.mxu0 0.0
    %723 = vmatpush1.msra.mxu0 %v407
    %724 = vmatprep.subr.mxu0 0.0
    %725 = vmatpush1.msra.mxu0 %v406
    %726 = vmatprep.subr.mxu0 0.0
    %727 = vmatpush1.msra.mxu0 %v405
    %728 = vmatprep.subr.mxu0 0.0
    %729 = vmatpush1.msra.mxu0 %v404
    %730 = vmatprep.subr.mxu0 0.0
    %731 = vmatpush1.msra.mxu0 %v403
    %732 = vmatprep.subr.mxu0 0.0
    %733 = vmatpush1.msra.mxu0 %v402
    %734 = vmatprep.subr.mxu0 0.0
    %735 = vmatpush1.msra.mxu0 %v401
    %736 = vmatprep.subr.mxu0 0.0
    %737 = vmatpush1.msra.mxu0 %v400
    %738 = vmatprep.subr.mxu0 0.0
    %739 = vmatpush1.msra.mxu0 %v399
    %740 = vmatprep.subr.mxu0 0.0
    %741 = vmatpush1.msra.mxu0 %v398
    %742 = vmatprep.subr.mxu0 0.0
    %743 = vmatpush1.msra.mxu0 %v397
    %744 = vmatprep.subr.mxu0 0.0
    %745 = vmatpush1.msra.mxu0 %v396
    %746 = vmatprep.subr.mxu0 0.0
    %747 = vmatpush2.msra.mxu0 0.0
    %748 = vmatprep.subr.mxu0 0.0
    %749 = vmatpush2.msra.mxu0 0.0
    %750 = vmatprep.subr.mxu0 0.0
    %751 = vmatpush2.msra.mxu0 0.0
    %752 = vmatprep.subr.mxu0 0.0
    %753 = vmatpush2.msra.mxu0 0.0
    %754 = vmatprep.subr.mxu0 0.0
    %755 = vmatpush2.msra.mxu0 0.0
    %756 = vmatprep.subr.mxu0 0.0
    %757 = vmatpush2.msra.mxu0 0.0
    %758 = vmatprep.subr.mxu0 0.0
    %759 = vmatpush2.msra.mxu0 0.0
    %760 = vmatprep.subr.mxu0 0.0
    %761 = vmatpush2.msra.mxu0 0.0
    %762 = vmatprep.subr.mxu0 0.0
    %763 = vmatpush2.msra.mxu0 0.0
    %764 = vmatprep.subr.mxu0 0.0
    %765 = vmatpush2.msra.mxu0 %v432
    %766 = vmatprep.subr.mxu0 0.0
    %767 = vmatpush2.msra.mxu0 %v417
    %768 = vmatprep.subr.mxu0 0.0
    %769 = vmatpush2.msra.mxu0 %v416
    %770 = vmatprep.subr.mxu0 0.0
    %771 = vmatpush2.msra.mxu0 %v415
    %772 = vmatprep.subr.mxu0 0.0
    %773 = vmatpush2.msra.mxu0 %v414
    %774 = vmatprep.subr.mxu0 0.0
    %775 = vmatpush2.msra.mxu0 %v413
    %776 = vmatprep.subr.mxu0 0.0
    %777 = vmatpush2.msra.mxu0 %v412
    %778 = vmatprep.mubr.f32.mxu0 %v428
    %779 = vmatmul.mubr.f32.gmra.mxu0 %v266
    %v780 = vpop.f32.mrf.mxu0
    %v781 = vadd.f32 %v711, %v780
    %v782 = vpop.f32.mrf.mxu0
    %783 = vdwg.mxu0
    %784 = vst [vmem:[#allocation11] sm:$0xff] %v781
    // Predicated region
    $region50: #{tpu_custom_call.1} parent=1 // pred_check
      _
    $region51: #{tpu_custom_call.1} parent=1 // pred_check_branch
      %786 = sbr.rel (0) target = $region53
    $region52: #{tpu_custom_call.1} parent=1 // pred_region
      %s788 = ssub.s32 256, 256
      %789 = vsyncadd [#allocation4], %s788
      %s791 = sshll.u32 [#allocation10], 4
      %s792 = int_to_ptr.vmem [resolvable:$true] %s791
      %794 = dma.vmem_to_hbm [thread:$0]  %s792, 256, %s8, [#allocation4]
    $region53: #{tpu_custom_call.1} parent=1 // pred_fallthru
      _
    // Predicated region
    $region54: #{tpu_custom_call.1} parent=1 // pred_check
      _
    $region55: #{tpu_custom_call.1} parent=1 // pred_check_branch
      %796 = sbr.rel (0) target = $region57
    $region56: #{tpu_custom_call.1} parent=1 // pred_region
      %s798 = ssub.s32 128, 128
      %799 = vsyncadd [#allocation12], %s798
      %s801 = sshll.u32 [#allocation11], 4
      %s802 = int_to_ptr.vmem [resolvable:$true] %s801
      %804 = dma.vmem_to_hbm [thread:$0]  %s802, 128, %s9, [#allocation12]
    $region57: #{tpu_custom_call.1} parent=1 // pred_fallthru
      _
    // Predicated region
    $region58: #{tpu_custom_call.1} parent=1 // pred_check
      _
    $region59: #{tpu_custom_call.1} parent=1 // pred_check_branch
      %806 = sbr.rel (0) target = $region61
    $region60: #{tpu_custom_call.1} parent=1 // pred_region
      %807 = dma.done [#allocation4], 256
    $region61: #{tpu_custom_call.1} parent=1 // pred_fallthru
      _
    // Predicated region
    $region62: #{tpu_custom_call.1} parent=1 // pred_check
      _
    $region63: #{tpu_custom_call.1} parent=1 // pred_check_branch
      %809 = sbr.rel (0) target = $region65
    $region64: #{tpu_custom_call.1} parent=1 // pred_region
      %810 = dma.done [#allocation12], 128
    $region65: #{tpu_custom_call.1} parent=1 // pred_fallthru
      _
    %811 = vsyncpa [#allocation3], 1
    %812 = vsyncpa [#allocation6], 1
    %813 = vsyncpa [#allocation9], 1
    %814 = vsyncpa [#allocation4], 1
    %815 = vsyncpa [#allocation12], 1

</llo_original>
